<compile_context>
chip_gen: v7x
topology: tpu7x:2x2x1
jax: 0.10.0
libtpu: 0.0.40
codegen_flags: <defaults>
</compile_context>

<pallas_src>
import jax
import jax.numpy as jnp
from jax.experimental import pallas as pl
from jax.experimental.pallas import tpu as pltpu


def _round_up(x, m):
    return ((x + m - 1) // m) * m


def _padded_tile_bytes(rows, cols, itemsize=4):
    # A VMEM tile pads its minor dims to (8 sublanes, 128 lanes).
    return _round_up(rows, 8) * _round_up(cols, 128) * itemsize


def mlp_kernel(x_ref, w1_ref, b1_ref, w2_ref, b2_ref, o_ref):
    # Transposed (batch-on-lanes) formulation:
    #   x_ref : (20, tb)  features on sublanes, batch on the lane axis
    #   w1_ref: (50, 20), b1_ref: (50, 1)    (native nn.Linear layout)
    #   w2_ref: (2, 50),  b2_ref: (2, 1)
    #   o_ref : (2, tb)   lane-dense output store
    x_t = x_ref[...]
    h = jnp.dot(w1_ref[...], x_t, preferred_element_type=jnp.float32) + b1_ref[...]
    h = jnp.maximum(h, 0.0)  # bias add / ReLU are free VPU filler under the MXU stream
    out = jnp.dot(w2_ref[...], h, preferred_element_type=jnp.float32) + b2_ref[...]
    o_ref[...] = out.astype(o_ref.dtype)


def classification_net_forward(x, w1, b1, w2, b2, *, tb=8192):
    """ClassificationNet forward: relu(x @ w1.T + b1) @ w2.T + b2.

    x: (B, 20) f32; w1: (50, 20); b1: (50,); w2: (2, 50); b2: (2,).
    Returns (B, 2) f32.
    """
    B, in_f = x.shape
    hid = w1.shape[0]
    out_f = w2.shape[0]

    # Present the batch on the lane axis; biases as column vectors so they
    # broadcast along lanes inside the kernel.
    x_t = x.T                      # (20, B)
    b1c = b1.reshape(hid, 1)       # (50, 1)
    b2c = b2.reshape(out_f, 1)     # (2, 1)

    # Batch (lane-axis) tile:
    #  - small batches: one full-array block (no padding, no partial blocks).
    #  - large batches: multiple-of-128 tile, capped so the grid has >= 2
    #    steps (v7x megacore via "parallel"); the last block may be partial,
    #    Pallas clips its DMAs so no padded copy of x is ever materialized.
    if B >= 256:
        tb_eff = min(int(tb), _round_up(pl.cdiv(B, 2), 128))
        tb_eff = max(128, (tb_eff // 128) * 128)
    else:
        tb_eff = B
    n_blocks = pl.cdiv(B, tb_eff)

    # Lane-padded VMEM footprint per grid step (double-buffered x/out tiles,
    # hidden activation, resident weights).  ~3.8 MiB at tb=8192.
    tile_bytes = (
        2 * _padded_tile_bytes(in_f, tb_eff)       # x tile, double-buffered
        + 2 * _padded_tile_bytes(out_f, tb_eff)    # out tile, double-buffered
        + _padded_tile_bytes(hid, tb_eff)          # hidden activation
        + _padded_tile_bytes(hid, in_f)            # w1
        + _padded_tile_bytes(hid, 1)               # b1
        + _padded_tile_bytes(out_f, hid)           # w2
        + _padded_tile_bytes(out_f, 1)             # b2
    )
    vmem_limit = int(min(64 << 20, max(16 << 20, 4 * tile_bytes)))

    weight_bytes = (in_f * hid + hid + hid * out_f + out_f) * 4
    cost = pl.CostEstimate(
        flops=2 * B * (in_f * hid + hid * out_f),
        transcendentals=0,
        bytes_accessed=B * (in_f + out_f) * 4 + weight_bytes,
    )

    out_t = pl.pallas_call(
        mlp_kernel,
        out_shape=jax.ShapeDtypeStruct((out_f, B), jnp.float32),
        grid_spec=pl.GridSpec(
            grid=(n_blocks,),
            in_specs=[
                # x streams block-by-block along the batch/lane axis.
                pl.BlockSpec((in_f, tb_eff), lambda i: (0, i)),
                # Weights/biases: constant index_map -> resident across steps.
                pl.BlockSpec((hid, in_f), lambda i: (0, 0)),
                pl.BlockSpec((hid, 1), lambda i: (0, 0)),
                pl.BlockSpec((out_f, hid), lambda i: (0, 0)),
                pl.BlockSpec((out_f, 1), lambda i: (0, 0)),
            ],
            # Lane-dense output: (2, tb) block, batch on the lane axis.
            out_specs=pl.BlockSpec((out_f, tb_eff), lambda i: (0, i)),
        ),
        compiler_params=pltpu.CompilerParams(
            dimension_semantics=("parallel",),
            vmem_limit_bytes=vmem_limit,
        ),
        cost_estimate=cost,
    )(x_t, w1, b1c, w2, b2c)

    # TODO(synk): optionally cast x/w1/w2 to bf16 (keeping f32 accumulation) to
    # guarantee single-pass MXU matmuls and halve the x DMA stream; kept f32
    # here to preserve the PyTorch f32 forward-pass numerics exactly.

    return out_t.T  # (B, 2)


def init_params(key):
    # Native nn.Linear shapes: fc1.weight (50,20), fc1.bias (50,),
    #                          fc2.weight (2,50),  fc2.bias (2,)
    k1, k2, k3, k4 = jax.random.split(key, 4)
    w1 = jax.random.normal(k1, (50, 20), dtype=jnp.float32) * 0.1
    b1 = jax.random.normal(k2, (50,), dtype=jnp.float32) * 0.1
    w2 = jax.random.normal(k3, (2, 50), dtype=jnp.float32) * 0.1
    b2 = jax.random.normal(k4, (2,), dtype=jnp.float32) * 0.1
    return w1, b1, w2, b2


def reference_forward(x, w1, b1, w2, b2):
    return jnp.maximum(x @ w1.T + b1, 0.0) @ w2.T + b2


if __name__ == "__main__":
    key = jax.random.PRNGKey(0)
    kx, kp = jax.random.split(key)

    batch = 8
    x = jax.random.normal(kx, (batch, 20), dtype=jnp.float32)
    w1, b1, w2, b2 = init_params(kp)

    out = jax.block_until_ready(classification_net_forward(x, w1, b1, w2, b2))
    ref = reference_forward(x, w1, b1, w2, b2)
    assert out.shape == (batch, 2)
    assert jnp.allclose(out, ref, atol=1e-4, rtol=1e-4)

    # Multi-step grid + partial last block (no jnp.pad copy of x).
    batch2 = 1000
    x2 = jax.random.normal(jax.random.PRNGKey(7), (batch2, 20), dtype=jnp.float32)
    out2 = jax.block_until_ready(
        classification_net_forward(x2, w1, b1, w2, b2, tb=256)
    )
    ref2 = reference_forward(x2, w1, b1, w2, b2)
    assert out2.shape == (batch2, 2)
    assert jnp.allclose(out2, ref2, atol=1e-4, rtol=1e-4)

    print("KERNEL_OK")
</pallas_src>

<mosaic_0001>
module attributes {stable_mosaic.version = 11 : i64} {
  func.func @mlp_kernel(%arg0: i32, %arg1: memref<20x8xf32, #tpu.memory_space<vmem>>, %arg2: memref<50x20xf32, #tpu.memory_space<vmem>>, %arg3: memref<50x1xf32, #tpu.memory_space<vmem>>, %arg4: memref<2x50xf32, #tpu.memory_space<vmem>>, %arg5: memref<2x1xf32, #tpu.memory_space<vmem>>, %arg6: memref<2x8xf32, #tpu.memory_space<vmem>>) attributes {dimension_semantics = [#tpu.dimension_semantics<parallel>], iteration_bounds = array<i64: 1>, scalar_prefetch = 0 : i64, scratch_operands = 0 : i64, tpu.core_type = #tpu.core_type<tc>, window_params = [{transform_indices = @transform_0, window_bounds = array<i64: 20, 8>}, {pipeline_mode = #tpu.pipeline_mode<synchronous>, transform_indices = @transform_1, window_bounds = array<i64: 50, 20>}, {pipeline_mode = #tpu.pipeline_mode<synchronous>, transform_indices = @transform_2, window_bounds = array<i64: 50, 1>}, {pipeline_mode = #tpu.pipeline_mode<synchronous>, transform_indices = @transform_3, window_bounds = array<i64: 2, 50>}, {pipeline_mode = #tpu.pipeline_mode<synchronous>, transform_indices = @transform_4, window_bounds = array<i64: 2, 1>}, {transform_indices = @transform_5, window_bounds = array<i64: 2, 8>}]} {
    %c0 = arith.constant 0 : index
    %c0_0 = arith.constant 0 : index
    %0 = vector.load %arg1[%c0, %c0_0] : memref<20x8xf32, #tpu.memory_space<vmem>>, vector<20x8xf32>
    %c0_1 = arith.constant 0 : index
    %c0_2 = arith.constant 0 : index
    %1 = vector.load %arg2[%c0_1, %c0_2] : memref<50x20xf32, #tpu.memory_space<vmem>>, vector<50x20xf32>
    %cst = arith.constant dense<0.000000e+00> : vector<50x8xf32>
    %2 = tpu.matmul %1, %0, %cst {dimension_numbers = #tpu.dot_dimension_numbers<[1], [0], [0], [1], [0, 0, 1, 1], [], []>} : vector<50x20xf32>, vector<20x8xf32>, vector<50x8xf32> -> vector<50x8xf32>
    %c0_3 = arith.constant 0 : index
    %c0_4 = arith.constant 0 : index
    %3 = vector.load %arg3[%c0_3, %c0_4] : memref<50x1xf32, #tpu.memory_space<vmem>>, vector<50x1xf32>
    %4 = vector.broadcast %3 : vector<50x1xf32> to vector<50x8xf32>
    %5 = arith.addf %2, %4 : vector<50x8xf32>
    %cst_5 = arith.constant 0.000000e+00 : f32
    %6 = vector.broadcast %cst_5 : f32 to vector<50x8xf32>
    %7 = arith.maximumf %5, %6 : vector<50x8xf32>
    %c0_6 = arith.constant 0 : index
    %c0_7 = arith.constant 0 : index
    %8 = vector.load %arg4[%c0_6, %c0_7] : memref<2x50xf32, #tpu.memory_space<vmem>>, vector<2x50xf32>
    %cst_8 = arith.constant dense<0.000000e+00> : vector<2x8xf32>
    %9 = tpu.matmul %8, %7, %cst_8 {dimension_numbers = #tpu.dot_dimension_numbers<[1], [0], [0], [1], [0, 0, 1, 1], [], []>} : vector<2x50xf32>, vector<50x8xf32>, vector<2x8xf32> -> vector<2x8xf32>
    %c0_9 = arith.constant 0 : index
    %c0_10 = arith.constant 0 : index
    %10 = vector.load %arg5[%c0_9, %c0_10] : memref<2x1xf32, #tpu.memory_space<vmem>>, vector<2x1xf32>
    %11 = vector.broadcast %10 : vector<2x1xf32> to vector<2x8xf32>
    %12 = arith.addf %9, %11 : vector<2x8xf32>
    %c0_11 = arith.constant 0 : index
    %c0_12 = arith.constant 0 : index
    %13 = vector.load %arg6[%c0_11, %c0_12] : memref<2x8xf32, #tpu.memory_space<vmem>>, vector<2x8xf32>
    tpu.vector_store %arg6[%c0_11, %c0_12], %12 {strides = array<i32>} : memref<2x8xf32, #tpu.memory_space<vmem>>, vector<2x8xf32>,
    return
  }
  func.func @transform_0(%arg0: i32) -> (i32, i32) {
    %c0_i32 = arith.constant 0 : i32
    %c0_i32_0 = arith.constant 0 : i32
    return %c0_i32, %arg0 : i32, i32
  }
  func.func @transform_1(%arg0: i32) -> (i32, i32) {
    %c0_i32 = arith.constant 0 : i32
    %c0_i32_0 = arith.constant 0 : i32
    %c0_i32_1 = arith.constant 0 : i32
    return %c0_i32, %c0_i32_0 : i32, i32
  }
  func.func @transform_2(%arg0: i32) -> (i32, i32) {
    %c0_i32 = arith.constant 0 : i32
    %c0_i32_0 = arith.constant 0 : i32
    %c0_i32_1 = arith.constant 0 : i32
    return %c0_i32, %c0_i32_0 : i32, i32
  }
  func.func @transform_3(%arg0: i32) -> (i32, i32) {
    %c0_i32 = arith.constant 0 : i32
    %c0_i32_0 = arith.constant 0 : i32
    %c0_i32_1 = arith.constant 0 : i32
    return %c0_i32, %c0_i32_0 : i32, i32
  }
  func.func @transform_4(%arg0: i32) -> (i32, i32) {
    %c0_i32 = arith.constant 0 : i32
    %c0_i32_0 = arith.constant 0 : i32
    %c0_i32_1 = arith.constant 0 : i32
    return %c0_i32, %c0_i32_0 : i32, i32
  }
  func.func @transform_5(%arg0: i32) -> (i32, i32) {
    %c0_i32 = arith.constant 0 : i32
    %c0_i32_0 = arith.constant 0 : i32
    return %c0_i32, %arg0 : i32, i32
  }
}

</mosaic_0001>

<llo_original>
// kernel: tpu_custom_call.1
$region0: #{tpu_custom_call.1}
  #allocation0 [shape = 'u32[]', space=smem, size = 0x4, offset = 0x4, fixed_abs, tag = 'smem constant byte address 0x4 - core index']
  #allocation1 [shape = 'u32[144,128]{1,0:T(1,128)}', space=vmem, size = 0x12000, scoped, tag = 'internal scratch']
  %s0 = inlined_call_operand.vmem [shape: f32[20,8], index: 0, kind: input, shape index: {}]
  %s1 = inlined_call_operand.vmem [shape: f32[50,20], index: 1, kind: input, shape index: {}]
  %s2 = inlined_call_operand.vmem [shape: f32[50,1], index: 2, kind: input, shape index: {}]
  %s3 = inlined_call_operand.vmem [shape: f32[2,50], index: 3, kind: input, shape index: {}]
  %s4 = inlined_call_operand.vmem [shape: f32[2,1], index: 4, kind: input, shape index: {}]
  %s5 = inlined_call_operand.hbm [shape: f32[2,8], index: 5, kind: output, shape index: {}]
  %s6 = sld [smem:[#allocation0]]
  $region30: #{tpu_custom_call.1} parent=0
    _
  %s8 = ssub.s32 1, %s6
  %s9 = scalar_select 0, %s8, %s6
  $region1: #{tpu_custom_call.1} parent=0
    #allocation2 [shape = 'u8[1024]{0}', space=vmem, size = 0x400, scoped, tag = 'output window, operand 0, single buffered']
    #allocation3 [shape = 's32[1]{0}', space=sflag, size = 0x4, scoped, tag = 'scoped memory for tpu_custom_call.1']
    %10 = vsyncpa [#allocation3], 0
    // Predicated region
    $region2: #{tpu_custom_call.1} parent=1 // pred_check
      _
    $region3: #{tpu_custom_call.1} parent=1 // pred_check_branch
      %12 = sbr.rel (0) target = $region5
    $region4: #{tpu_custom_call.1} parent=1 // pred_region
      _
    $region5: #{tpu_custom_call.1} parent=1 // pred_fallthru
      _
    // Predicated region
    $region6: #{tpu_custom_call.1} parent=1 // pred_check
      _
    $region7: #{tpu_custom_call.1} parent=1 // pred_check_branch
      %14 = sbr.rel (0) target = $region9
    $region8: #{tpu_custom_call.1} parent=1 // pred_region
      _
    $region9: #{tpu_custom_call.1} parent=1 // pred_fallthru
      _
    // Predicated region
    $region10: #{tpu_custom_call.1} parent=1 // pred_check
      _
    $region11: #{tpu_custom_call.1} parent=1 // pred_check_branch
      %16 = sbr.rel (0) target = $region13
    $region12: #{tpu_custom_call.1} parent=1 // pred_region
      _
    $region13: #{tpu_custom_call.1} parent=1 // pred_fallthru
      _
    // Predicated region
    $region14: #{tpu_custom_call.1} parent=1 // pred_check
      _
    $region15: #{tpu_custom_call.1} parent=1 // pred_check_branch
      %18 = sbr.rel (0) target = $region17
    $region16: #{tpu_custom_call.1} parent=1 // pred_region
      _
    $region17: #{tpu_custom_call.1} parent=1 // pred_fallthru
      _
    // Predicated region
    $region18: #{tpu_custom_call.1} parent=1 // pred_check
      _
    $region19: #{tpu_custom_call.1} parent=1 // pred_check_branch
      %20 = sbr.rel (0) target = $region21
    $region20: #{tpu_custom_call.1} parent=1 // pred_region
      _
    $region21: #{tpu_custom_call.1} parent=1 // pred_fallthru
      _
    %v21 = vld [vmem:[%s0] sm:$0xff]
    %v22 = vld [vmem:[%s0 + $0x8] sm:$0xff]
    %v23 = vld [vmem:[%s0 + $0x10] sm:$0xf]
    %v24 = vld [vmem:[%s1] sm:$0xff]
    %v25 = vld [vmem:[%s1 + $0x8] sm:$0xff]
    %v26 = vld [vmem:[%s1 + $0x10] sm:$0xff]
    %v27 = vld [vmem:[%s1 + $0x18] sm:$0xff]
    %v28 = vld [vmem:[%s1 + $0x20] sm:$0xff]
    %v29 = vld [vmem:[%s1 + $0x28] sm:$0xff]
    %v30 = vld [vmem:[%s1 + $0x30] sm:$0x3]
    %v31 = vld [vmem:[%s2] sm:$0xff]
    %v32 = vld [vmem:[%s2 + $0x8] sm:$0xff]
    %v33 = vld [vmem:[%s2 + $0x10] sm:$0xff]
    %v34 = vld [vmem:[%s2 + $0x18] sm:$0xff]
    %v35 = vld [vmem:[%s2 + $0x20] sm:$0xff]
    %v36 = vld [vmem:[%s2 + $0x28] sm:$0xff]
    %v37 = vld [vmem:[%s2 + $0x30] sm:$0x3]
    %39 = vset.pattern.permute.xlu0 0
    %40 = vperm.xlu0 %39, %v31
    %v41 = vpop.permute.xlu0 %40
    %44 = vset.pattern.permute.xlu0 0
    %45 = vperm.xlu0 %44, %v32
    %v46 = vpop.permute.xlu0 %45
    %49 = vset.pattern.permute.xlu0 0
    %50 = vperm.xlu0 %49, %v33
    %v51 = vpop.permute.xlu0 %50
    %54 = vset.pattern.permute.xlu0 0
    %55 = vperm.xlu0 %54, %v34
    %v56 = vpop.permute.xlu0 %55
    %59 = vset.pattern.permute.xlu0 0
    %60 = vperm.xlu0 %59, %v35
    %v61 = vpop.permute.xlu0 %60
    %64 = vset.pattern.permute.xlu0 0
    %65 = vperm.xlu0 %64, %v36
    %v66 = vpop.permute.xlu0 %65
    %69 = vset.pattern.permute.xlu0 0
    %70 = vperm.xlu0 %69, %v37
    %v71 = vpop.permute.xlu0 %70
    %vm73 = vcmask 162816
    %v75 = vsel %vm73, %v24, 0
    %v78 = vsel %vm73, %v25, 0
    %v81 = vsel %vm73, %v26, 0
    %v84 = vsel %vm73, %v27, 0
    %v87 = vsel %vm73, %v28, 0
    %v90 = vsel %vm73, %v29, 0
    %v93 = vsel %vm73, %v30, 0
    %vm95 = vcmask 1043456
    %v97 = vsel %vm95, %v23, 0
    %99 = vmatprep.subr.mxu0 0.0
    %100 = vmatpush1.msra.mxu0 %v21
    %101 = vmatprep.subr.mxu0 0.0
    %102 = vmatpush1.msra.mxu0 %v22
    %103 = vmatprep.subr.mxu0 0.0
    %104 = vmatpush1.msra.mxu0 %v97
    %105 = vmatprep.subr.mxu0 0.0
    %106 = vmatpush1.msra.mxu0 0.0
    %107 = vmatprep.subr.mxu0 0.0
    %108 = vmatpush1.msra.mxu0 0.0
    %109 = vmatprep.subr.mxu0 0.0
    %110 = vmatpush1.msra.mxu0 0.0
    %111 = vmatprep.subr.mxu0 0.0
    %112 = vmatpush1.msra.mxu0 0.0
    %113 = vmatprep.subr.mxu0 0.0
    %114 = vmatpush1.msra.mxu0 0.0
    %115 = vmatprep.subr.mxu0 0.0
    %116 = vmatpush1.msra.mxu0 0.0
    %117 = vmatprep.subr.mxu0 0.0
    %118 = vmatpush1.msra.mxu0 0.0
    %119 = vmatprep.subr.mxu0 0.0
    %120 = vmatpush1.msra.mxu0 0.0
    %121 = vmatprep.subr.mxu0 0.0
    %122 = vmatpush1.msra.mxu0 0.0
    %123 = vmatprep.subr.mxu0 0.0
    %124 = vmatpush1.msra.mxu0 0.0
    %125 = vmatprep.subr.mxu0 0.0
    %126 = vmatpush1.msra.mxu0 0.0
    %127 = vmatprep.subr.mxu0 0.0
    %128 = vmatpush1.msra.mxu0 0.0
    %129 = vmatprep.subr.mxu0 0.0
    %130 = vmatpush1.msra.mxu0 0.0
    %131 = vmatprep.subr.mxu0 0.0
    %132 = vmatpush1.msra.mxu0 0.0
    %133 = vmatprep.subr.mxu0 0.0
    %134 = vmatpush1.msra.mxu0 0.0
    %135 = vmatprep.subr.mxu0 0.0
    %136 = vmatpush1.msra.mxu0 0.0
    %137 = vmatprep.subr.mxu0 0.0
    %138 = vmatpush1.msra.mxu0 0.0
    %139 = vmatprep.subr.mxu0 0.0
    %140 = vmatpush1.msra.mxu0 0.0
    %141 = vmatprep.subr.mxu0 0.0
    %142 = vmatpush1.msra.mxu0 0.0
    %143 = vmatprep.subr.mxu0 0.0
    %144 = vmatpush1.msra.mxu0 0.0
    %145 = vmatprep.subr.mxu0 0.0
    %146 = vmatpush1.msra.mxu0 0.0
    %147 = vmatprep.subr.mxu0 0.0
    %148 = vmatpush1.msra.mxu0 0.0
    %149 = vmatprep.subr.mxu0 0.0
    %150 = vmatpush1.msra.mxu0 0.0
    %151 = vmatprep.subr.mxu0 0.0
    %152 = vmatpush1.msra.mxu0 0.0
    %153 = vmatprep.subr.mxu0 0.0
    %154 = vmatpush1.msra.mxu0 0.0
    %155 = vmatprep.subr.mxu0 0.0
    %156 = vmatpush1.msra.mxu0 0.0
    %157 = vmatprep.subr.mxu0 0.0
    %158 = vmatpush1.msra.mxu0 0.0
    %159 = vmatprep.subr.mxu0 0.0
    %160 = vmatpush1.msra.mxu0 0.0
    %161 = vmatprep.subr.mxu0 0.0
    %162 = vmatpush1.msra.mxu0 0.0
    %163 = vmatprep.mubr.f32.mxu0 0.0
    %164 = vmatmul.mubr.f32.gmra.mrb[0].mxu0 %v75
    %v165 = vpop.f32.mrb[0].mxu0
    %v166 = vadd.f32 %v41, %v165
    %v167 = vpop.f32.mrb[0].mxu0
    %168 = vmatprep.mubr.f32.mxu0 0.0
    %169 = vmatmul.mubr.f32.gmra.mrb[0].mxu0 %v78
    %v170 = vpop.f32.mrb[0].mxu0
    %v171 = vadd.f32 %v46, %v170
    %v172 = vpop.f32.mrb[0].mxu0
    %173 = vmatprep.mubr.f32.mxu0 0.0
    %174 = vmatmul.mubr.f32.gmra.mrb[0].mxu0 %v81
    %v175 = vpop.f32.mrb[0].mxu0
    %v176 = vadd.f32 %v51, %v175
    %v177 = vpop.f32.mrb[0].mxu0
    %178 = vmatprep.mubr.f32.mxu0 0.0
    %179 = vmatmul.mubr.f32.gmra.mrb[0].mxu0 %v84
    %v180 = vpop.f32.mrb[0].mxu0
    %v181 = vadd.f32 %v56, %v180
    %v182 = vpop.f32.mrb[0].mxu0
    %183 = vmatprep.mubr.f32.mxu0 0.0
    %184 = vmatmul.mubr.f32.gmra.mrb[0].mxu0 %v87
    %v185 = vpop.f32.mrb[0].mxu0
    %v186 = vadd.f32 %v61, %v185
    %v187 = vpop.f32.mrb[0].mxu0
    %188 = vmatprep.mubr.f32.mxu0 0.0
    %189 = vmatmul.mubr.f32.gmra.mrb[0].mxu0 %v90
    %v190 = vpop.f32.mrb[0].mxu0
    %v191 = vadd.f32 %v66, %v190
    %v192 = vpop.f32.mrb[0].mxu0
    %193 = vmatprep.mubr.f32.mxu0 0.0
    %194 = vmatmul.mubr.f32.gmra.mrb[0].mxu0 %v93
    %v195 = vpop.f32.mrb[0].mxu0
    %v196 = vadd.f32 %v71, %v195
    %v197 = vpop.f32.mrb[0].mxu0
    %198 = vdwg.mxu0
    %v199 = vmax.f32 %v166, 0.0
    %v200 = vmax.f32 %v171, 0.0
    %v201 = vmax.f32 %v176, 0.0
    %v202 = vmax.f32 %v181, 0.0
    %v203 = vmax.f32 %v186, 0.0
    %v204 = vmax.f32 %v191, 0.0
    %v205 = vmax.f32 %v196, 0.0
    %v206 = vld [vmem:[%s3] sm:$0x3]
    %v207 = vld [vmem:[%s4] sm:$0x3]
    %209 = vset.pattern.permute.xlu0 0
    %210 = vperm.xlu0 %209, %v207
    %v211 = vpop.permute.xlu0 %210
    %vm213 = vcmask 408576
    %v215 = vsel %vm213, %v206, 0
    %vm217 = vcmask 1041408
    %v219 = vsel %vm217, %v205, 0
    %221 = vmatprep.subr.mxu0 0.0
    %222 = vmatpush1.msra.mxu0 %v199
    %223 = vmatprep.subr.mxu0 0.0
    %224 = vmatpush1.msra.mxu0 %v200
    %225 = vmatprep.subr.mxu0 0.0
    %226 = vmatpush1.msra.mxu0 %v201
    %227 = vmatprep.subr.mxu0 0.0
    %228 = vmatpush1.msra.mxu0 %v202
    %229 = vmatprep.subr.mxu0 0.0
    %230 = vmatpush1.msra.mxu0 %v203
    %231 = vmatprep.subr.mxu0 0.0
    %232 = vmatpush1.msra.mxu0 %v204
    %233 = vmatprep.subr.mxu0 0.0
    %234 = vmatpush1.msra.mxu0 %v219
    %235 = vmatprep.subr.mxu0 0.0
    %236 = vmatpush1.msra.mxu0 0.0
    %237 = vmatprep.subr.mxu0 0.0
    %238 = vmatpush1.msra.mxu0 0.0
    %239 = vmatprep.subr.mxu0 0.0
    %240 = vmatpush1.msra.mxu0 0.0
    %241 = vmatprep.subr.mxu0 0.0
    %242 = vmatpush1.msra.mxu0 0.0
    %243 = vmatprep.subr.mxu0 0.0
    %244 = vmatpush1.msra.mxu0 0.0
    %245 = vmatprep.subr.mxu0 0.0
    %246 = vmatpush1.msra.mxu0 0.0
    %247 = vmatprep.subr.mxu0 0.0
    %248 = vmatpush1.msra.mxu0 0.0
    %249 = vmatprep.subr.mxu0 0.0
    %250 = vmatpush1.msra.mxu0 0.0
    %251 = vmatprep.subr.mxu0 0.0
    %252 = vmatpush1.msra.mxu0 0.0
    %253 = vmatprep.subr.mxu0 0.0
    %254 = vmatpush1.msra.mxu0 0.0
    %255 = vmatprep.subr.mxu0 0.0
    %256 = vmatpush1.msra.mxu0 0.0
    %257 = vmatprep.subr.mxu0 0.0
    %258 = vmatpush1.msra.mxu0 0.0
    %259 = vmatprep.subr.mxu0 0.0
    %260 = vmatpush1.msra.mxu0 0.0
    %261 = vmatprep.subr.mxu0 0.0
    %262 = vmatpush1.msra.mxu0 0.0
    %263 = vmatprep.subr.mxu0 0.0
    %264 = vmatpush1.msra.mxu0 0.0
    %265 = vmatprep.subr.mxu0 0.0
    %266 = vmatpush1.msra.mxu0 0.0
    %267 = vmatprep.subr.mxu0 0.0
    %268 = vmatpush1.msra.mxu0 0.0
    %269 = vmatprep.subr.mxu0 0.0
    %270 = vmatpush1.msra.mxu0 0.0
    %271 = vmatprep.subr.mxu0 0.0
    %272 = vmatpush1.msra.mxu0 0.0
    %273 = vmatprep.subr.mxu0 0.0
    %274 = vmatpush1.msra.mxu0 0.0
    %275 = vmatprep.subr.mxu0 0.0
    %276 = vmatpush1.msra.mxu0 0.0
    %277 = vmatprep.subr.mxu0 0.0
    %278 = vmatpush1.msra.mxu0 0.0
    %279 = vmatprep.subr.mxu0 0.0
    %280 = vmatpush1.msra.mxu0 0.0
    %281 = vmatprep.subr.mxu0 0.0
    %282 = vmatpush1.msra.mxu0 0.0
    %283 = vmatprep.subr.mxu0 0.0
    %284 = vmatpush1.msra.mxu0 0.0
    %285 = vmatprep.mubr.f32.mxu0 0.0
    %286 = vmatmul.mubr.f32.gmra.mrb[0].mxu0 %v215
    %v287 = vpop.f32.mrb[0].mxu0
    %v288 = vadd.f32 %v211, %v287
    %v289 = vpop.f32.mrb[0].mxu0
    %290 = vdwg.mxu0
    %vm291 = vcmask 58368
    %292 = vst.msk [vmem:[#allocation2] sm:$0x3] %vm291, %v288
    // Predicated region
    $region22: #{tpu_custom_call.1} parent=1 // pred_check
      _
    $region23: #{tpu_custom_call.1} parent=1 // pred_check_branch
      %294 = sbr.rel (0) target = $region25
    $region24: #{tpu_custom_call.1} parent=1 // pred_region
      %s296 = ssub.s32 32, 32
      %297 = vsyncadd [#allocation3], %s296
      %s299 = sshll.u32 [#allocation2], 4
      %s300 = int_to_ptr.vmem [resolvable:$true] %s299
      %302 = dma.vmem_to_hbm [thread:$0]  %s300, 32, %s5, [#allocation3]
    $region25: #{tpu_custom_call.1} parent=1 // pred_fallthru
      _
    // Predicated region
    $region26: #{tpu_custom_call.1} parent=1 // pred_check
      _
    $region27: #{tpu_custom_call.1} parent=1 // pred_check_branch
      %304 = sbr.rel (0) target = $region29
    $region28: #{tpu_custom_call.1} parent=1 // pred_region
      %305 = dma.done [#allocation3], 32
    $region29: #{tpu_custom_call.1} parent=1 // pred_fallthru
      _
    %306 = vsyncpa [#allocation3], 1

</llo_original>
